<compile_context>
chip_gen: v5e
topology: v5e:2x2
jax: 0.10.0
libtpu: 0.0.40
codegen_flags: <defaults>
</compile_context>

<pallas_src>
import jax
import jax.numpy as jnp
from jax.experimental import pallas as pl
from jax.experimental.pallas import tpu as pltpu

# ---------------- config (small, deterministic) ----------------
EMBEDDING_SIZE = 32
HIDDEN_SIZE = 32
N_LAYERS = 2
VOCAB_SIZE = 256

# The packed (2L, IN, 3H) gate-weight tensor assumes E == H for layers >= 1
# (same implicit assumption the stacked per-layer layout always had).
assert EMBEDDING_SIZE == HIDDEN_SIZE


def decoder_seq_kernel(tok_ref,    # SMEM (T,) int32, scalar prefetch
                       emb_ref,    # VMEM (V, 1, E)      bf16  resident table
                       h0_ref,     # VMEM (L, H)         f32
                       wg_ref,     # VMEM (2L, IN, 3H)   bf16  [W_ih_l, W_hh_l], gates r|z|n
                       bias_ref,   # VMEM (L, 4H)        f32   [b_r | b_z | b_in | b_hn]
                       wout_ref,   # VMEM (H, V)         bf16
                       bout_ref,   # VMEM (1, V)         f32
                       logp_ref,   # out  (1, 1, V)      f32   per-step block
                       hout_ref,   # out  (L, H)         f32   written at last step only
                       h_scr):     # VMEM scratch (L, H) f32   carried hidden state
    H = HIDDEN_SIZE
    t = pl.program_id(0)

    # Initialize the carried hidden state from h0 on the first step.
    @pl.when(t == 0)
    def _():
        h_scr[...] = h0_ref[...]

    # In-kernel embedding gather from the VMEM-resident table.
    tok = tok_ref[t]
    x = emb_ref[tok].astype(jnp.float32)                       # (1, E) f32

    # GRU cell per layer, single time step.  PyTorch gate order: r, z, n.
    for l in range(N_LAYERS):
        h = h_scr[l:l + 1, :]                                  # (1, H) f32
        xb = x.astype(jnp.bfloat16)
        hb = h.astype(jnp.bfloat16)

        # One packed dot per x and per h; gate extraction is static lane slices.
        gi = jnp.dot(xb, wg_ref[2 * l + 0], preferred_element_type=jnp.float32)  # (1, 3H)
        gh = jnp.dot(hb, wg_ref[2 * l + 1], preferred_element_type=jnp.float32)  # (1, 3H)
        b = bias_ref[l:l + 1, :]                               # (1, 4H) f32

        r = jax.nn.sigmoid(gi[:, 0:H] + gh[:, 0:H] + b[:, 0:H])
        z = jax.nn.sigmoid(gi[:, H:2 * H] + gh[:, H:2 * H] + b[:, H:2 * H])
        n = jnp.tanh(gi[:, 2 * H:3 * H] + b[:, 2 * H:3 * H]
                     + r * (gh[:, 2 * H:3 * H] + b[:, 3 * H:4 * H]))
        h_new = n + z * (h - n)                                # == (1-z)*n + z*h

        h_scr[l:l + 1, :] = h_new                              # direct row store
        x = h_new                                              # feeds next layer (E == H)

    # output projection + stable log_softmax over vocab (dim=1)
    logits = jnp.dot(x.astype(jnp.bfloat16), wout_ref[...],
                     preferred_element_type=jnp.float32) + bout_ref[...]   # (1, V) f32
    m = jnp.max(logits, axis=1, keepdims=True)
    shifted = logits - m
    lse = jnp.log(jnp.sum(jnp.exp(shifted), axis=1, keepdims=True))
    logp_ref[0] = shifted - lse

    # Final hidden state is written back to HBM once, after the last step.
    @pl.when(t == pl.num_programs(0) - 1)
    def _():
        hout_ref[...] = h_scr[...]


def decoder_forward_seq(tokens, last_hidden, params):
    """Run T decoder forward() steps in ONE pallas_call (teacher forcing).

    tokens: (T,) int32 token ids; last_hidden: (L, 1, H) f32.
    Returns: logp (T, V) f32 (one log_softmax row per step), hidden (L, 1, H) f32.
    """
    tokens = jnp.asarray(tokens, dtype=jnp.int32).reshape(-1)
    T = int(tokens.shape[0])
    h0 = last_hidden.reshape(N_LAYERS, HIDDEN_SIZE).astype(jnp.float32)

    def const(shape):
        return pl.BlockSpec(shape, lambda t, tok: (0,) * len(shape))

    grid_spec = pltpu.PrefetchScalarGridSpec(
        num_scalar_prefetch=1,
        grid=(T,),
        in_specs=[
            const((VOCAB_SIZE, 1, EMBEDDING_SIZE)),                    # embedding (resident)
            const((N_LAYERS, HIDDEN_SIZE)),                            # h0
            const((2 * N_LAYERS, EMBEDDING_SIZE, 3 * HIDDEN_SIZE)),    # packed gate weights
            const((N_LAYERS, 4 * HIDDEN_SIZE)),                        # packed biases (2,128)
            const((HIDDEN_SIZE, VOCAB_SIZE)),                          # w_out
            const((1, VOCAB_SIZE)),                                    # b_out
        ],
        out_specs=(
            pl.BlockSpec((1, 1, VOCAB_SIZE), lambda t, tok: (t, 0, 0)),  # per-step logp
            const((N_LAYERS, HIDDEN_SIZE)),                              # final hidden
        ),
        scratch_shapes=[pltpu.VMEM((N_LAYERS, HIDDEN_SIZE), jnp.float32)],
    )

    logp3, h_final = pl.pallas_call(
        decoder_seq_kernel,
        out_shape=(
            jax.ShapeDtypeStruct((T, 1, VOCAB_SIZE), jnp.float32),
            jax.ShapeDtypeStruct((N_LAYERS, HIDDEN_SIZE), jnp.float32),
        ),
        grid_spec=grid_spec,
        compiler_params=pltpu.CompilerParams(
            dimension_semantics=("arbitrary",)),   # hidden state carries across steps
    )(
        tokens,
        params["embedding"], h0, params["wg"], params["bias"],
        params["w_out"], params["b_out"],
    )
    return logp3.reshape(T, VOCAB_SIZE), h_final.reshape(N_LAYERS, 1, HIDDEN_SIZE)


def decoder_forward(input_word, last_hidden, params):
    """Single-step interface matching the PyTorch module's forward()."""
    tokens = jnp.asarray(input_word, dtype=jnp.int32).reshape((1,))
    return decoder_forward_seq(tokens, last_hidden, params)


def decoder_reference_seq(tokens, last_hidden, params):
    """Pure-JAX mirror of the kernel (same bf16 weight / f32 accumulation flow)."""
    H = HIDDEN_SIZE
    emb = params["embedding"].reshape(VOCAB_SIZE, EMBEDDING_SIZE)
    wg, bias = params["wg"], params["bias"]
    h = last_hidden.reshape(N_LAYERS, HIDDEN_SIZE).astype(jnp.float32)
    logps = []
    for t in range(int(tokens.shape[0])):
        x = emb[tokens[t]].astype(jnp.float32).reshape(1, EMBEDDING_SIZE)
        rows = []
        for l in range(N_LAYERS):
            hl = h[l:l + 1, :]
            xb = x.astype(jnp.bfloat16)
            hb = hl.astype(jnp.bfloat16)
            gi = jnp.dot(xb, wg[2 * l + 0], preferred_element_type=jnp.float32)
            gh = jnp.dot(hb, wg[2 * l + 1], preferred_element_type=jnp.float32)
            b = bias[l:l + 1, :]
            r = jax.nn.sigmoid(gi[:, 0:H] + gh[:, 0:H] + b[:, 0:H])
            z = jax.nn.sigmoid(gi[:, H:2 * H] + gh[:, H:2 * H] + b[:, H:2 * H])
            n = jnp.tanh(gi[:, 2 * H:3 * H] + b[:, 2 * H:3 * H]
                         + r * (gh[:, 2 * H:3 * H] + b[:, 3 * H:4 * H]))
            h_new = (1.0 - z) * n + z * hl
            rows.append(h_new)
            x = h_new
        h = jnp.concatenate(rows, axis=0)
        logits = jnp.dot(x.astype(jnp.bfloat16), params["w_out"],
                         preferred_element_type=jnp.float32) + params["b_out"]
        logps.append(jax.nn.log_softmax(logits, axis=1))
    return jnp.concatenate(logps, axis=0), h.reshape(N_LAYERS, 1, HIDDEN_SIZE)


def init_params(key):
    ks = jax.random.split(key, 7)
    scale = 0.1
    E, H, L, V = EMBEDDING_SIZE, HIDDEN_SIZE, N_LAYERS, VOCAB_SIZE
    emb = scale * jax.random.normal(ks[0], (V, E), jnp.float32)
    # gate order along the 3H axis: r | z | n (PyTorch GRU order), pre-transposed (x @ W)
    w_ih = scale * jax.random.normal(ks[1], (L, E, 3 * H), jnp.float32)
    w_hh = scale * jax.random.normal(ks[2], (L, H, 3 * H), jnp.float32)
    b_ih = scale * jax.random.normal(ks[3], (L, 3 * H), jnp.float32)
    b_hh = scale * jax.random.normal(ks[4], (L, 3 * H), jnp.float32)
    w_out = scale * jax.random.normal(ks[5], (H, V), jnp.float32)
    b_out = scale * jax.random.normal(ks[6], (1, V), jnp.float32)

    # [W_ih_l, W_hh_l] interleaved along the leading dim (requires E == H for l >= 1).
    wg = jnp.stack([w_ih, w_hh], axis=1).reshape(2 * L, E, 3 * H)
    # Lane-dense (L, 4H) = (2, 128) f32 bias slab: [b_ir+b_hr | b_iz+b_hz | b_in | b_hn].
    # b_hn stays separate because it must remain inside r * (h_n + b_hn).
    bias = jnp.concatenate([
        b_ih[:, 0:H] + b_hh[:, 0:H],
        b_ih[:, H:2 * H] + b_hh[:, H:2 * H],
        b_ih[:, 2 * H:3 * H],
        b_hh[:, 2 * H:3 * H],
    ], axis=1)

    return {
        # bf16 weights are a deliberate quantization of the f32 module (halves the
        # resident VMEM footprint); matmuls accumulate in f32, biases / gates stay f32.
        "embedding": emb.reshape(V, 1, E).astype(jnp.bfloat16),
        "wg": wg.astype(jnp.bfloat16),
        "bias": bias.astype(jnp.float32),
        "w_out": w_out.astype(jnp.bfloat16),
        "b_out": b_out.astype(jnp.float32),
    }


if __name__ == "__main__":
    key = jax.random.PRNGKey(0)
    kp, kh, kt = jax.random.split(key, 3)
    params = init_params(kp)

    SEQ_LEN = 8
    tokens = jax.random.randint(kt, (SEQ_LEN,), 0, VOCAB_SIZE, dtype=jnp.int32)
    last_hidden = 0.1 * jax.random.normal(kh, (N_LAYERS, 1, HIDDEN_SIZE), jnp.float32)

    # Multi-step: SEQ_LEN forward() calls fused into one pallas_call
    # (weights / embedding DMA'd once and VMEM-resident across all steps).
    logp, hidden = decoder_forward_seq(tokens, last_hidden, params)
    jax.block_until_ready((logp, hidden))

    assert logp.shape == (SEQ_LEN, VOCAB_SIZE)
    assert hidden.shape == (N_LAYERS, 1, HIDDEN_SIZE)
    # every log_softmax row must (approximately) exponentiate-sum to 1
    row_sums = jnp.sum(jnp.exp(logp), axis=1)
    assert jnp.allclose(row_sums, jnp.ones_like(row_sums), atol=1e-3)

    # numerical check against a pure-JAX reference with the same dtype flow
    logp_ref, hidden_ref = decoder_reference_seq(tokens, last_hidden, params)
    assert jnp.allclose(logp, logp_ref, atol=2e-2), float(jnp.max(jnp.abs(logp - logp_ref)))
    assert jnp.allclose(hidden, hidden_ref, atol=2e-2), float(jnp.max(jnp.abs(hidden - hidden_ref)))

    # single-step interface (matches the PyTorch module's forward signature)
    logp1, hidden1 = decoder_forward(jnp.array(7, dtype=jnp.int32), last_hidden, params)
    jax.block_until_ready((logp1, hidden1))
    assert logp1.shape == (1, VOCAB_SIZE)
    assert hidden1.shape == (N_LAYERS, 1, HIDDEN_SIZE)

    print("KERNEL_OK")
</pallas_src>

<mosaic_0001>
module attributes {stable_mosaic.version = 11 : i64} {
  func.func @decoder_seq_kernel(%arg0: i32, %arg1: memref<8xi32, #tpu.memory_space<smem>>, %arg2: memref<256x1x32xbf16, #tpu.memory_space<vmem>>, %arg3: memref<2x32xf32, #tpu.memory_space<vmem>>, %arg4: memref<4x32x96xbf16, #tpu.memory_space<vmem>>, %arg5: memref<2x128xf32, #tpu.memory_space<vmem>>, %arg6: memref<32x256xbf16, #tpu.memory_space<vmem>>, %arg7: memref<1x256xf32, #tpu.memory_space<vmem>>, %arg8: memref<1x1x256xf32, #tpu.memory_space<vmem>>, %arg9: memref<2x32xf32, #tpu.memory_space<vmem>>, %arg10: memref<2x32xf32, #tpu.memory_space<vmem>>) attributes {dimension_semantics = [#tpu.dimension_semantics<arbitrary>], iteration_bounds = array<i64: 8>, scalar_prefetch = 1 : i64, scratch_operands = 1 : i64, tpu.core_type = #tpu.core_type<tc>, window_params = [{pipeline_mode = #tpu.pipeline_mode<synchronous>, transform_indices = @transform_0, window_bounds = array<i64: 256, 1, 32>}, {pipeline_mode = #tpu.pipeline_mode<synchronous>, transform_indices = @transform_1, window_bounds = array<i64: 2, 32>}, {pipeline_mode = #tpu.pipeline_mode<synchronous>, transform_indices = @transform_2, window_bounds = array<i64: 4, 32, 96>}, {pipeline_mode = #tpu.pipeline_mode<synchronous>, transform_indices = @transform_3, window_bounds = array<i64: 2, 128>}, {pipeline_mode = #tpu.pipeline_mode<synchronous>, transform_indices = @transform_4, window_bounds = array<i64: 32, 256>}, {pipeline_mode = #tpu.pipeline_mode<synchronous>, transform_indices = @transform_5, window_bounds = array<i64: 1, 256>}, {transform_indices = @transform_6, window_bounds = array<i64: 1, 1, 256>}, {pipeline_mode = #tpu.pipeline_mode<synchronous>, transform_indices = @transform_7, window_bounds = array<i64: 2, 32>}]} {
    %c0_i32 = arith.constant 0 : i32
    %0 = arith.cmpi eq, %arg0, %c0_i32 : i32
    %1 = arith.extui %0 : i1 to i32
    %c0_i32_0 = arith.constant 0 : i32
    %2 = arith.cmpi ne, %1, %c0_i32_0 : i32
    scf.if %2 {
      %c0_41 = arith.constant 0 : index
      %c0_42 = arith.constant 0 : index
      %116 = vector.load %arg3[%c0_41, %c0_42] : memref<2x32xf32, #tpu.memory_space<vmem>>, vector<2x32xf32>
      %c0_43 = arith.constant 0 : index
      %c0_44 = arith.constant 0 : index
      %117 = vector.load %arg10[%c0_43, %c0_44] : memref<2x32xf32, #tpu.memory_space<vmem>>, vector<2x32xf32>
      tpu.vector_store %arg10[%c0_43, %c0_44], %116 {strides = array<i32>} : memref<2x32xf32, #tpu.memory_space<vmem>>, vector<2x32xf32>,
    } else {
    }
    %3 = arith.index_cast %arg0 : i32 to index
    %4 = memref.load %arg1[%3] : memref<8xi32, #tpu.memory_space<smem>>
    %5 = arith.index_cast %4 : i32 to index
    %c0 = arith.constant 0 : index
    %c0_1 = arith.constant 0 : index
    %6 = vector.load %arg2[%5, %c0, %c0_1] : memref<256x1x32xbf16, #tpu.memory_space<vmem>>, vector<1x1x32xbf16>
    %7 = vector.shape_cast %6 : vector<1x1x32xbf16> to vector<1x32xbf16>
    %8 = arith.extf %7 : vector<1x32xbf16> to vector<1x32xf32>
    %c0_2 = arith.constant 0 : index
    %c0_3 = arith.constant 0 : index
    %9 = vector.load %arg10[%c0_2, %c0_3] : memref<2x32xf32, #tpu.memory_space<vmem>>, vector<1x32xf32>
    %10 = arith.truncf %8 : vector<1x32xf32> to vector<1x32xbf16>
    %11 = arith.truncf %9 : vector<1x32xf32> to vector<1x32xbf16>
    %c0_4 = arith.constant 0 : index
    %c0_5 = arith.constant 0 : index
    %c0_6 = arith.constant 0 : index
    %12 = vector.load %arg4[%c0_4, %c0_5, %c0_6] : memref<4x32x96xbf16, #tpu.memory_space<vmem>>, vector<1x32x96xbf16>
    %13 = vector.shape_cast %12 : vector<1x32x96xbf16> to vector<32x96xbf16>
    %cst = arith.constant dense<0.000000e+00> : vector<1x96xf32>
    %14 = tpu.matmul %10, %13, %cst {dimension_numbers = #tpu.dot_dimension_numbers<[1], [0], [0], [1], [0, 0, 1, 1], [], []>} : vector<1x32xbf16>, vector<32x96xbf16>, vector<1x96xf32> -> vector<1x96xf32>
    %c1 = arith.constant 1 : index
    %c0_7 = arith.constant 0 : index
    %c0_8 = arith.constant 0 : index
    %15 = vector.load %arg4[%c1, %c0_7, %c0_8] : memref<4x32x96xbf16, #tpu.memory_space<vmem>>, vector<1x32x96xbf16>
    %16 = vector.shape_cast %15 : vector<1x32x96xbf16> to vector<32x96xbf16>
    %cst_9 = arith.constant dense<0.000000e+00> : vector<1x96xf32>
    %17 = tpu.matmul %11, %16, %cst_9 {dimension_numbers = #tpu.dot_dimension_numbers<[1], [0], [0], [1], [0, 0, 1, 1], [], []>} : vector<1x32xbf16>, vector<32x96xbf16>, vector<1x96xf32> -> vector<1x96xf32>
    %c0_10 = arith.constant 0 : index
    %c0_11 = arith.constant 0 : index
    %18 = vector.load %arg5[%c0_10, %c0_11] : memref<2x128xf32, #tpu.memory_space<vmem>>, vector<1x128xf32>
    %19 = vector.extract_strided_slice %14 {offsets = [0, 0], sizes = [1, 32], strides = [1, 1]} : vector<1x96xf32> to vector<1x32xf32>
    %20 = vector.extract_strided_slice %17 {offsets = [0, 0], sizes = [1, 32], strides = [1, 1]} : vector<1x96xf32> to vector<1x32xf32>
    %21 = arith.addf %19, %20 : vector<1x32xf32>
    %22 = vector.extract_strided_slice %18 {offsets = [0, 0], sizes = [1, 32], strides = [1, 1]} : vector<1x128xf32> to vector<1x32xf32>
    %23 = arith.addf %21, %22 : vector<1x32xf32>
    %24 = arith.negf %23 : vector<1x32xf32>
    %25 = math.exp %24 : vector<1x32xf32>
    %cst_12 = arith.constant 1.000000e+00 : f32
    %26 = vector.broadcast %cst_12 : f32 to vector<1x32xf32>
    %27 = arith.addf %26, %25 : vector<1x32xf32>
    %28 = arith.divf %26, %27 : vector<1x32xf32>
    %29 = vector.extract_strided_slice %14 {offsets = [0, 32], sizes = [1, 32], strides = [1, 1]} : vector<1x96xf32> to vector<1x32xf32>
    %30 = vector.extract_strided_slice %17 {offsets = [0, 32], sizes = [1, 32], strides = [1, 1]} : vector<1x96xf32> to vector<1x32xf32>
    %31 = arith.addf %29, %30 : vector<1x32xf32>
    %32 = vector.extract_strided_slice %18 {offsets = [0, 32], sizes = [1, 32], strides = [1, 1]} : vector<1x128xf32> to vector<1x32xf32>
    %33 = arith.addf %31, %32 : vector<1x32xf32>
    %34 = arith.negf %33 : vector<1x32xf32>
    %35 = math.exp %34 : vector<1x32xf32>
    %cst_13 = arith.constant 1.000000e+00 : f32
    %36 = vector.broadcast %cst_13 : f32 to vector<1x32xf32>
    %37 = arith.addf %36, %35 : vector<1x32xf32>
    %38 = arith.divf %36, %37 : vector<1x32xf32>
    %39 = vector.extract_strided_slice %14 {offsets = [0, 64], sizes = [1, 32], strides = [1, 1]} : vector<1x96xf32> to vector<1x32xf32>
    %40 = vector.extract_strided_slice %18 {offsets = [0, 64], sizes = [1, 32], strides = [1, 1]} : vector<1x128xf32> to vector<1x32xf32>
    %41 = arith.addf %39, %40 : vector<1x32xf32>
    %42 = vector.extract_strided_slice %17 {offsets = [0, 64], sizes = [1, 32], strides = [1, 1]} : vector<1x96xf32> to vector<1x32xf32>
    %43 = vector.extract_strided_slice %18 {offsets = [0, 96], sizes = [1, 32], strides = [1, 1]} : vector<1x128xf32> to vector<1x32xf32>
    %44 = arith.addf %42, %43 : vector<1x32xf32>
    %45 = arith.mulf %28, %44 : vector<1x32xf32>
    %46 = arith.addf %41, %45 : vector<1x32xf32>
    %47 = math.tanh %46 : vector<1x32xf32>
    %48 = arith.subf %9, %47 : vector<1x32xf32>
    %49 = arith.mulf %38, %48 : vector<1x32xf32>
    %50 = arith.addf %47, %49 : vector<1x32xf32>
    %c0_14 = arith.constant 0 : index
    %c0_15 = arith.constant 0 : index
    %51 = vector.load %arg10[%c0_14, %c0_15] : memref<2x32xf32, #tpu.memory_space<vmem>>, vector<1x32xf32>
    tpu.vector_store %arg10[%c0_14, %c0_15], %50 {strides = array<i32>} : memref<2x32xf32, #tpu.memory_space<vmem>>, vector<1x32xf32>,
    %c1_16 = arith.constant 1 : index
    %c0_17 = arith.constant 0 : index
    %52 = vector.load %arg10[%c1_16, %c0_17] : memref<2x32xf32, #tpu.memory_space<vmem>>, vector<1x32xf32>
    %53 = arith.truncf %50 : vector<1x32xf32> to vector<1x32xbf16>
    %54 = arith.truncf %52 : vector<1x32xf32> to vector<1x32xbf16>
    %c2 = arith.constant 2 : index
    %c0_18 = arith.constant 0 : index
    %c0_19 = arith.constant 0 : index
    %55 = vector.load %arg4[%c2, %c0_18, %c0_19] : memref<4x32x96xbf16, #tpu.memory_space<vmem>>, vector<1x32x96xbf16>
    %56 = vector.shape_cast %55 : vector<1x32x96xbf16> to vector<32x96xbf16>
    %cst_20 = arith.constant dense<0.000000e+00> : vector<1x96xf32>
    %57 = tpu.matmul %53, %56, %cst_20 {dimension_numbers = #tpu.dot_dimension_numbers<[1], [0], [0], [1], [0, 0, 1, 1], [], []>} : vector<1x32xbf16>, vector<32x96xbf16>, vector<1x96xf32> -> vector<1x96xf32>
    %c3 = arith.constant 3 : index
    %c0_21 = arith.constant 0 : index
    %c0_22 = arith.constant 0 : index
    %58 = vector.load %arg4[%c3, %c0_21, %c0_22] : memref<4x32x96xbf16, #tpu.memory_space<vmem>>, vector<1x32x96xbf16>
    %59 = vector.shape_cast %58 : vector<1x32x96xbf16> to vector<32x96xbf16>
    %cst_23 = arith.constant dense<0.000000e+00> : vector<1x96xf32>
    %60 = tpu.matmul %54, %59, %cst_23 {dimension_numbers = #tpu.dot_dimension_numbers<[1], [0], [0], [1], [0, 0, 1, 1], [], []>} : vector<1x32xbf16>, vector<32x96xbf16>, vector<1x96xf32> -> vector<1x96xf32>
    %c1_24 = arith.constant 1 : index
    %c0_25 = arith.constant 0 : index
    %61 = vector.load %arg5[%c1_24, %c0_25] : memref<2x128xf32, #tpu.memory_space<vmem>>, vector<1x128xf32>
    %62 = vector.extract_strided_slice %57 {offsets = [0, 0], sizes = [1, 32], strides = [1, 1]} : vector<1x96xf32> to vector<1x32xf32>
    %63 = vector.extract_strided_slice %60 {offsets = [0, 0], sizes = [1, 32], strides = [1, 1]} : vector<1x96xf32> to vector<1x32xf32>
    %64 = arith.addf %62, %63 : vector<1x32xf32>
    %65 = vector.extract_strided_slice %61 {offsets = [0, 0], sizes = [1, 32], strides = [1, 1]} : vector<1x128xf32> to vector<1x32xf32>
    %66 = arith.addf %64, %65 : vector<1x32xf32>
    %67 = arith.negf %66 : vector<1x32xf32>
    %68 = math.exp %67 : vector<1x32xf32>
    %cst_26 = arith.constant 1.000000e+00 : f32
    %69 = vector.broadcast %cst_26 : f32 to vector<1x32xf32>
    %70 = arith.addf %69, %68 : vector<1x32xf32>
    %71 = arith.divf %69, %70 : vector<1x32xf32>
    %72 = vector.extract_strided_slice %57 {offsets = [0, 32], sizes = [1, 32], strides = [1, 1]} : vector<1x96xf32> to vector<1x32xf32>
    %73 = vector.extract_strided_slice %60 {offsets = [0, 32], sizes = [1, 32], strides = [1, 1]} : vector<1x96xf32> to vector<1x32xf32>
    %74 = arith.addf %72, %73 : vector<1x32xf32>
    %75 = vector.extract_strided_slice %61 {offsets = [0, 32], sizes = [1, 32], strides = [1, 1]} : vector<1x128xf32> to vector<1x32xf32>
    %76 = arith.addf %74, %75 : vector<1x32xf32>
    %77 = arith.negf %76 : vector<1x32xf32>
    %78 = math.exp %77 : vector<1x32xf32>
    %cst_27 = arith.constant 1.000000e+00 : f32
    %79 = vector.broadcast %cst_27 : f32 to vector<1x32xf32>
    %80 = arith.addf %79, %78 : vector<1x32xf32>
    %81 = arith.divf %79, %80 : vector<1x32xf32>
    %82 = vector.extract_strided_slice %57 {offsets = [0, 64], sizes = [1, 32], strides = [1, 1]} : vector<1x96xf32> to vector<1x32xf32>
    %83 = vector.extract_strided_slice %61 {offsets = [0, 64], sizes = [1, 32], strides = [1, 1]} : vector<1x128xf32> to vector<1x32xf32>
    %84 = arith.addf %82, %83 : vector<1x32xf32>
    %85 = vector.extract_strided_slice %60 {offsets = [0, 64], sizes = [1, 32], strides = [1, 1]} : vector<1x96xf32> to vector<1x32xf32>
    %86 = vector.extract_strided_slice %61 {offsets = [0, 96], sizes = [1, 32], strides = [1, 1]} : vector<1x128xf32> to vector<1x32xf32>
    %87 = arith.addf %85, %86 : vector<1x32xf32>
    %88 = arith.mulf %71, %87 : vector<1x32xf32>
    %89 = arith.addf %84, %88 : vector<1x32xf32>
    %90 = math.tanh %89 : vector<1x32xf32>
    %91 = arith.subf %52, %90 : vector<1x32xf32>
    %92 = arith.mulf %81, %91 : vector<1x32xf32>
    %93 = arith.addf %90, %92 : vector<1x32xf32>
    %c1_28 = arith.constant 1 : index
    %c0_29 = arith.constant 0 : index
    %94 = vector.load %arg10[%c1_28, %c0_29] : memref<2x32xf32, #tpu.memory_space<vmem>>, vector<1x32xf32>
    tpu.vector_store %arg10[%c1_28, %c0_29], %93 {strides = array<i32>} : memref<2x32xf32, #tpu.memory_space<vmem>>, vector<1x32xf32>,
    %95 = arith.truncf %93 : vector<1x32xf32> to vector<1x32xbf16>
    %c0_30 = arith.constant 0 : index
    %c0_31 = arith.constant 0 : index
    %96 = vector.load %arg6[%c0_30, %c0_31] : memref<32x256xbf16, #tpu.memory_space<vmem>>, vector<32x256xbf16>
    %cst_32 = arith.constant dense<0.000000e+00> : vector<1x256xf32>
    %97 = tpu.matmul %95, %96, %cst_32 {dimension_numbers = #tpu.dot_dimension_numbers<[1], [0], [0], [1], [0, 0, 1, 1], [], []>} : vector<1x32xbf16>, vector<32x256xbf16>, vector<1x256xf32> -> vector<1x256xf32>
    %c0_33 = arith.constant 0 : index
    %c0_34 = arith.constant 0 : index
    %98 = vector.load %arg7[%c0_33, %c0_34] : memref<1x256xf32, #tpu.memory_space<vmem>>, vector<1x256xf32>
    %99 = arith.addf %97, %98 : vector<1x256xf32>
    %cst_35 = arith.constant dense<0xFF800000> : vector<1xf32>
    %100 = vector.multi_reduction <maximumf>, %99, %cst_35 [1] : vector<1x256xf32> to vector<1xf32>
    %101 = vector.shape_cast %100 : vector<1xf32> to vector<1x1xf32>
    %102 = vector.broadcast %101 : vector<1x1xf32> to vector<1x256xf32>
    %103 = arith.subf %99, %102 : vector<1x256xf32>
    %104 = math.exp %103 : vector<1x256xf32>
    %cst_36 = arith.constant dense<0.000000e+00> : vector<1xf32>
    %105 = vector.multi_reduction <add>, %104, %cst_36 [1] : vector<1x256xf32> to vector<1xf32>
    %106 = vector.shape_cast %105 : vector<1xf32> to vector<1x1xf32>
    %107 = math.log %106 : vector<1x1xf32>
    %108 = vector.broadcast %107 : vector<1x1xf32> to vector<1x256xf32>
    %109 = arith.subf %103, %108 : vector<1x256xf32>
    %c0_37 = arith.constant 0 : index
    %c0_38 = arith.constant 0 : index
    %c0_39 = arith.constant 0 : index
    %110 = vector.load %arg8[%c0_37, %c0_38, %c0_39] : memref<1x1x256xf32, #tpu.memory_space<vmem>>, vector<1x1x256xf32>
    %111 = vector.shape_cast %110 : vector<1x1x256xf32> to vector<1x256xf32>
    %112 = vector.shape_cast %109 : vector<1x256xf32> to vector<1x1x256xf32>
    tpu.vector_store %arg8[%c0_37, %c0_38, %c0_39], %112 {strides = array<i32>} : memref<1x1x256xf32, #tpu.memory_space<vmem>>, vector<1x1x256xf32>,
    %c7_i32 = arith.constant 7 : i32
    %113 = arith.cmpi eq, %arg0, %c7_i32 : i32
    %114 = arith.extui %113 : i1 to i32
    %c0_i32_40 = arith.constant 0 : i32
    %115 = arith.cmpi ne, %114, %c0_i32_40 : i32
    scf.if %115 {
      %c0_41 = arith.constant 0 : index
      %c0_42 = arith.constant 0 : index
      %116 = vector.load %arg10[%c0_41, %c0_42] : memref<2x32xf32, #tpu.memory_space<vmem>>, vector<2x32xf32>
      %c0_43 = arith.constant 0 : index
      %c0_44 = arith.constant 0 : index
      %117 = vector.load %arg9[%c0_43, %c0_44] : memref<2x32xf32, #tpu.memory_space<vmem>>, vector<2x32xf32>
      tpu.vector_store %arg9[%c0_43, %c0_44], %116 {strides = array<i32>} : memref<2x32xf32, #tpu.memory_space<vmem>>, vector<2x32xf32>,
    } else {
    }
    return
  }
  func.func @transform_0(%arg0: i32, %arg1: memref<8xi32, #tpu.memory_space<smem>>) -> (i32, i32, i32) {
    %c0_i32 = arith.constant 0 : i32
    %c0_i32_0 = arith.constant 0 : i32
    %c0_i32_1 = arith.constant 0 : i32
    %c0_i32_2 = arith.constant 0 : i32
    return %c0_i32, %c0_i32_0, %c0_i32_1 : i32, i32, i32
  }
  func.func @transform_1(%arg0: i32, %arg1: memref<8xi32, #tpu.memory_space<smem>>) -> (i32, i32) {
    %c0_i32 = arith.constant 0 : i32
    %c0_i32_0 = arith.constant 0 : i32
    %c0_i32_1 = arith.constant 0 : i32
    return %c0_i32, %c0_i32_0 : i32, i32
  }
  func.func @transform_2(%arg0: i32, %arg1: memref<8xi32, #tpu.memory_space<smem>>) -> (i32, i32, i32) {
    %c0_i32 = arith.constant 0 : i32
    %c0_i32_0 = arith.constant 0 : i32
    %c0_i32_1 = arith.constant 0 : i32
    %c0_i32_2 = arith.constant 0 : i32
    return %c0_i32, %c0_i32_0, %c0_i32_1 : i32, i32, i32
  }
  func.func @transform_3(%arg0: i32, %arg1: memref<8xi32, #tpu.memory_space<smem>>) -> (i32, i32) {
    %c0_i32 = arith.constant 0 : i32
    %c0_i32_0 = arith.constant 0 : i32
    %c0_i32_1 = arith.constant 0 : i32
    return %c0_i32, %c0_i32_0 : i32, i32
  }
  func.func @transform_4(%arg0: i32, %arg1: memref<8xi32, #tpu.memory_space<smem>>) -> (i32, i32) {
    %c0_i32 = arith.constant 0 : i32
    %c0_i32_0 = arith.constant 0 : i32
    %c0_i32_1 = arith.constant 0 : i32
    return %c0_i32, %c0_i32_0 : i32, i32
  }
  func.func @transform_5(%arg0: i32, %arg1: memref<8xi32, #tpu.memory_space<smem>>) -> (i32, i32) {
    %c0_i32 = arith.constant 0 : i32
    %c0_i32_0 = arith.constant 0 : i32
    %c0_i32_1 = arith.constant 0 : i32
    return %c0_i32, %c0_i32_0 : i32, i32
  }
  func.func @transform_6(%arg0: i32, %arg1: memref<8xi32, #tpu.memory_space<smem>>) -> (i32, i32, i32) {
    %c0_i32 = arith.constant 0 : i32
    %c0_i32_0 = arith.constant 0 : i32
    %c0_i32_1 = arith.constant 0 : i32
    return %arg0, %c0_i32, %c0_i32_0 : i32, i32, i32
  }
  func.func @transform_7(%arg0: i32, %arg1: memref<8xi32, #tpu.memory_space<smem>>) -> (i32, i32) {
    %c0_i32 = arith.constant 0 : i32
    %c0_i32_0 = arith.constant 0 : i32
    %c0_i32_1 = arith.constant 0 : i32
    return %c0_i32, %c0_i32_0 : i32, i32
  }
}

</mosaic_0001>

<llo_original>
// kernel: tpu_custom_call.1
$region0: #{tpu_custom_call.1}
  #allocation0 [shape = 'u32[]', space=smem, size = 0x4, offset = 0x4, fixed_abs, tag = 'smem constant byte address 0x4 - core index']
  #allocation1 [shape = 'u32[72,128]{1,0:T(1,128)}', space=vmem, size = 0x9000, scoped, tag = 'internal scratch']
  #allocation2 [shape = 'f32[2,32]{1,0:T(2,128)}', space=vmem, size = 0x400, scoped, tag = 'scratch operand']
  #allocation3 [shape = 's32[1]{0}', space=sflag, size = 0x4, scoped, tag = 'scoped memory for tpu_custom_call.1']
  #allocation4 [shape = 'u8[512]{0}', space=smem, size = 0x200, scoped, tag = 'prefetched SMEM operand 0']
  %s0 = inlined_call_operand.vmem [shape: s32[8], index: 0, kind: input, shape index: {}]
  %s1 = inlined_call_operand.vmem [shape: bf16[256,1,32], index: 1, kind: input, shape index: {}]
  %s2 = inlined_call_operand.vmem [shape: f32[2,32], index: 2, kind: input, shape index: {}]
  %s3 = inlined_call_operand.vmem [shape: bf16[4,32,96], index: 3, kind: input, shape index: {}]
  %s4 = inlined_call_operand.vmem [shape: f32[2,128], index: 4, kind: input, shape index: {}]
  %s5 = inlined_call_operand.vmem [shape: bf16[32,256], index: 5, kind: input, shape index: {}]
  %s6 = inlined_call_operand.vmem [shape: f32[1,256], index: 6, kind: input, shape index: {}]
  %s7 = inlined_call_operand.hbm [shape: f32[8,1,256], index: 7, kind: output, shape index: {0}]
  %s8 = inlined_call_operand.hbm [shape: f32[2,32], index: 8, kind: output, shape index: {1}]
  %9 = xla_tuple %s7, %s8
  %s10 = sld [smem:[#allocation0]]
  $region73: #{tpu_custom_call.1} parent=0
    _
  %s12 = ssub.s32 1, %s10
  %s13 = scalar_select 0, %s12, %s10
  %s15 = sshll.u32 %s0, 4
  %s16 = int_to_ptr.vmem [resolvable:$true] %s15
  %18 = dma.vmem_to_smem %s16, 16, [#allocation4], [#allocation3]
  %20 = dma.done [#allocation3], 16
  %21 = sfence
  $region1: #{tpu_custom_call.1} parent=0
    #allocation5 [shape = 'u8[2048]{0}', space=vmem, size = 0x800, scoped, tag = 'output window, operand 0']
    #allocation6 [shape = 's32[2]{0}', space=sflag, size = 0x8, scoped, tag = 'scoped memory for tpu_custom_call.1']
    #allocation7 [shape = 'u8[1024]{0}', space=vmem, size = 0x400, scoped, tag = 'output window, operand 1, single buffered']
    #allocation8 [shape = 's32[1]{0}', space=sflag, size = 0x4, scoped, tag = 'scoped memory for tpu_custom_call.1']
    %22 = vsyncpa [#allocation6], 0
    %s23 = scalar_lea.sflag [#allocation6], 1
    %24 = vsyncpa %s23, 0
    %25 = vsyncpa [#allocation8], 0
    loop: start=0, step=1, limit=10
    $region2: #{tpu_custom_call.1} parent=1 // loop_pre_header
      _
    $region3: #{tpu_custom_call.1} parent=1 // loop_header
      %s27 = sphi 0, %s31
      %p28 = scmp.ge.s32.totalorder %s27, 10
      %s35 = sphi 0, %s35
      %s37 = sphi 0, %s35
      %s38 = sphi 0, %s37
      %s52 = sphi 0, %s38
      %s56 = sphi 0, %s56
      %s58 = sphi 0, %s56
      %s59 = sphi 0, %s58
      %s73 = sphi 0, %s59
      %s77 = sphi 0, %s77
      %s79 = sphi 0, %s77
      %s80 = sphi 0, %s79
      %s94 = sphi 0, %s80
      %s98 = sphi 0, %s98
      %s100 = sphi 0, %s98
      %s101 = sphi 0, %s100
      %s115 = sphi 0, %s101
      %s119 = sphi 0, %s119
      %s121 = sphi 0, %s119
      %s122 = sphi 0, %s121
      %s136 = sphi 0, %s122
      %s140 = sphi 0, %s140
      %s142 = sphi 0, %s140
      %s143 = sphi 0, %s142
      %s157 = sphi 0, %s143
      %s163 = sphi 0, %s165
      %s166 = sphi 0, %s163
      %s167 = sphi 0, %s166
      %s183 = sphi 0, %s167
      %s187 = sphi 0, %s187
      %s189 = sphi 0, %s187
      %s190 = sphi 0, %s189
      %s204 = sphi 0, %s190
    $region4: #{tpu_custom_call.1} parent=1 // loop_header_branch
      %30 = sbr.rel (%p28) target = $region8
    $region5: #{tpu_custom_call.1} parent=1 // loop_body
      %s32 = ssub.s32 %s27, 1
      %s33 = ssub.s32 %s27, 2
      %s34 = sadd.s32 %s27, 1
      %s36 = sadd.s32 %s35, 1
      %p39 = scmp.eq.s32.totalorder %s27, 7
      %p40 = scmp.ne.s32.totalorder %s35, %s37
      %p41 = scmp.eq.s32.totalorder %s27, 0
      %p42 = por %p40, %p41
      %p43 = scmp.ne.s32.totalorder %s35, %s37
      %p44 = scmp.eq.s32.totalorder %s32, 7
      %p45 = por %p43, %p44
      %p46 = scmp.ne.s32.totalorder %s37, %s38
      %p47 = scmp.eq.s32.totalorder %s32, 0
      %p48 = por %p46, %p47
      %p49 = scmp.ne.s32.totalorder %s37, %s38
      %p50 = scmp.eq.s32.totalorder %s33, 7
      %p51 = por %p49, %p50
      %p53 = scmp.ne.s32.totalorder %s38, %s52
      %p54 = scmp.eq.s32.totalorder %s33, 0
      %p55 = por %p53, %p54
      %s57 = sadd.s32 %s56, 1
      %p60 = scmp.eq.s32.totalorder %s27, 7
      %p61 = scmp.ne.s32.totalorder %s56, %s58
      %p62 = scmp.eq.s32.totalorder %s27, 0
      %p63 = por %p61, %p62
      %p64 = scmp.ne.s32.totalorder %s56, %s58
      %p65 = scmp.eq.s32.totalorder %s32, 7
      %p66 = por %p64, %p65
      %p67 = scmp.ne.s32.totalorder %s58, %s59
      %p68 = scmp.eq.s32.totalorder %s32, 0
      %p69 = por %p67, %p68
      %p70 = scmp.ne.s32.totalorder %s58, %s59
      %p71 = scmp.eq.s32.totalorder %s33, 7
      %p72 = por %p70, %p71
      %p74 = scmp.ne.s32.totalorder %s59, %s73
      %p75 = scmp.eq.s32.totalorder %s33, 0
      %p76 = por %p74, %p75
      %s78 = sadd.s32 %s77, 1
      %p81 = scmp.eq.s32.totalorder %s27, 7
      %p82 = scmp.ne.s32.totalorder %s77, %s79
      %p83 = scmp.eq.s32.totalorder %s27, 0
      %p84 = por %p82, %p83
      %p85 = scmp.ne.s32.totalorder %s77, %s79
      %p86 = scmp.eq.s32.totalorder %s32, 7
      %p87 = por %p85, %p86
      %p88 = scmp.ne.s32.totalorder %s79, %s80
      %p89 = scmp.eq.s32.totalorder %s32, 0
      %p90 = por %p88, %p89
      %p91 = scmp.ne.s32.totalorder %s79, %s80
      %p92 = scmp.eq.s32.totalorder %s33, 7
      %p93 = por %p91, %p92
      %p95 = scmp.ne.s32.totalorder %s80, %s94
      %p96 = scmp.eq.s32.totalorder %s33, 0
      %p97 = por %p95, %p96
      %s99 = sadd.s32 %s98, 1
      %p102 = scmp.eq.s32.totalorder %s27, 7
      %p103 = scmp.ne.s32.totalorder %s98, %s100
      %p104 = scmp.eq.s32.totalorder %s27, 0
      %p105 = por %p103, %p104
      %p106 = scmp.ne.s32.totalorder %s98, %s100
      %p107 = scmp.eq.s32.totalorder %s32, 7
      %p108 = por %p106, %p107
      %p109 = scmp.ne.s32.totalorder %s100, %s101
      %p110 = scmp.eq.s32.totalorder %s32, 0
      %p111 = por %p109, %p110
      %p112 = scmp.ne.s32.totalorder %s100, %s101
      %p113 = scmp.eq.s32.totalorder %s33, 7
      %p114 = por %p112, %p113
      %p116 = scmp.ne.s32.totalorder %s101, %s115
      %p117 = scmp.eq.s32.totalorder %s33, 0
      %p118 = por %p116, %p117
      %s120 = sadd.s32 %s119, 1
      %p123 = scmp.eq.s32.totalorder %s27, 7
      %p124 = scmp.ne.s32.totalorder %s119, %s121
      %p125 = scmp.eq.s32.totalorder %s27, 0
      %p126 = por %p124, %p125
      %p127 = scmp.ne.s32.totalorder %s119, %s121
      %p128 = scmp.eq.s32.totalorder %s32, 7
      %p129 = por %p127, %p128
      %p130 = scmp.ne.s32.totalorder %s121, %s122
      %p131 = scmp.eq.s32.totalorder %s32, 0
      %p132 = por %p130, %p131
      %p133 = scmp.ne.s32.totalorder %s121, %s122
      %p134 = scmp.eq.s32.totalorder %s33, 7
      %p135 = por %p133, %p134
      %p137 = scmp.ne.s32.totalorder %s122, %s136
      %p138 = scmp.eq.s32.totalorder %s33, 0
      %p139 = por %p137, %p138
      %s141 = sadd.s32 %s140, 1
      %p144 = scmp.eq.s32.totalorder %s27, 7
      %p145 = scmp.ne.s32.totalorder %s140, %s142
      %p146 = scmp.eq.s32.totalorder %s27, 0
      %p147 = por %p145, %p146
      %p148 = scmp.ne.s32.totalorder %s140, %s142
      %p149 = scmp.eq.s32.totalorder %s32, 7
      %p150 = por %p148, %p149
      %p151 = scmp.ne.s32.totalorder %s142, %s143
      %p152 = scmp.eq.s32.totalorder %s32, 0
      %p153 = por %p151, %p152
      %p154 = scmp.ne.s32.totalorder %s142, %s143
      %p155 = scmp.eq.s32.totalorder %s33, 7
      %p156 = por %p154, %p155
      %p158 = scmp.ne.s32.totalorder %s143, %s157
      %p159 = scmp.eq.s32.totalorder %s33, 0
      %p160 = por %p158, %p159
      %s161 = ssub.s32 %s27, %s34
      %p162 = scmp.eq.s32.totalorder %s161, 0
      %s164 = sadd.s32 %s163, 1
      %s165 = scalar_select %p162, %s163, %s164
      %p168 = pneg %p162
      %p169 = scmp.eq.s32.totalorder %s27, 7
      %p170 = por %p168, %p169
      %p171 = scmp.ne.s32.totalorder %s163, %s166
      %p172 = scmp.eq.s32.totalorder %s27, 0
      %p173 = por %p171, %p172
      %p174 = scmp.ne.s32.totalorder %s163, %s166
      %p175 = scmp.eq.s32.totalorder %s32, 7
      %p176 = por %p174, %p175
      %p177 = scmp.ne.s32.totalorder %s166, %s167
      %p178 = scmp.eq.s32.totalorder %s32, 0
      %p179 = por %p177, %p178
      %p180 = scmp.ne.s32.totalorder %s166, %s167
      %p181 = scmp.eq.s32.totalorder %s33, 7
      %p182 = por %p180, %p181
      %p184 = scmp.ne.s32.totalorder %s167, %s183
      %p185 = scmp.eq.s32.totalorder %s33, 0
      %p186 = por %p184, %p185
      %s188 = sadd.s32 %s187, 1
      %p191 = scmp.eq.s32.totalorder %s27, 7
      %p192 = scmp.ne.s32.totalorder %s187, %s189
      %p193 = scmp.eq.s32.totalorder %s27, 0
      %p194 = por %p192, %p193
      %p195 = scmp.ne.s32.totalorder %s187, %s189
      %p196 = scmp.eq.s32.totalorder %s32, 7
      %p197 = por %p195, %p196
      %p198 = scmp.ne.s32.totalorder %s189, %s190
      %p199 = scmp.eq.s32.totalorder %s32, 0
      %p200 = por %p198, %p199
      %p201 = scmp.ne.s32.totalorder %s189, %s190
      %p202 = scmp.eq.s32.totalorder %s33, 7
      %p203 = por %p201, %p202
      %p205 = scmp.ne.s32.totalorder %s190, %s204
      %p206 = scmp.eq.s32.totalorder %s33, 0
      %p207 = por %p205, %p206
      %p208 = scmp.le.s32.totalorder 1, %s27
      %p209 = scmp.lt.s32.totalorder %s27, 9
      %p210 = pnand %p208, %p209
      %p211 = pneg %p210
      // Predicated region
      $region9: #{tpu_custom_call.1} parent=5 // pred_check
        _
      $region10: #{tpu_custom_call.1} parent=5 // pred_check_branch
        %213 = sbr.rel (%p210) target = $region12
      $region11: #{tpu_custom_call.1} parent=5 // pred_region
        %s214 = ssub.s32 %s27, 1
        // Predicated region
        $region13: #{tpu_custom_call.1} parent=11 // pred_check
          %p215 = pneg %p48
        $region14: #{tpu_custom_call.1} parent=11 // pred_check_branch
          %217 = sbr.rel (%p215) target = $region16
        $region15: #{tpu_custom_call.1} parent=11 // pred_region
          _
        $region16: #{tpu_custom_call.1} parent=11 // pred_fallthru
          _
        // Predicated region
        $region17: #{tpu_custom_call.1} parent=11 // pred_check
          %p218 = pneg %p69
        $region18: #{tpu_custom_call.1} parent=11 // pred_check_branch
          %220 = sbr.rel (%p218) target = $region20
        $region19: #{tpu_custom_call.1} parent=11 // pred_region
          _
        $region20: #{tpu_custom_call.1} parent=11 // pred_fallthru
          _
        // Predicated region
        $region21: #{tpu_custom_call.1} parent=11 // pred_check
          %p221 = pneg %p90
        $region22: #{tpu_custom_call.1} parent=11 // pred_check_branch
          %223 = sbr.rel (%p221) target = $region24
        $region23: #{tpu_custom_call.1} parent=11 // pred_region
          _
        $region24: #{tpu_custom_call.1} parent=11 // pred_fallthru
          _
        // Predicated region
        $region25: #{tpu_custom_call.1} parent=11 // pred_check
          %p224 = pneg %p111
        $region26: #{tpu_custom_call.1} parent=11 // pred_check_branch
          %226 = sbr.rel (%p224) target = $region28
        $region27: #{tpu_custom_call.1} parent=11 // pred_region
          _
        $region28: #{tpu_custom_call.1} parent=11 // pred_fallthru
          _
        // Predicated region
        $region29: #{tpu_custom_call.1} parent=11 // pred_check
          %p227 = pneg %p132
        $region30: #{tpu_custom_call.1} parent=11 // pred_check_branch
          %229 = sbr.rel (%p227) target = $region32
        $region31: #{tpu_custom_call.1} parent=11 // pred_region
          _
        $region32: #{tpu_custom_call.1} parent=11 // pred_fallthru
          _
        // Predicated region
        $region33: #{tpu_custom_call.1} parent=11 // pred_check
          %p230 = pneg %p153
        $region34: #{tpu_custom_call.1} parent=11 // pred_check_branch
          %232 = sbr.rel (%p230) target = $region36
        $region35: #{tpu_custom_call.1} parent=11 // pred_region
          _
        $region36: #{tpu_custom_call.1} parent=11 // pred_fallthru
          _
      $region12: #{tpu_custom_call.1} parent=5 // pred_fallthru
        _
      %p233 = scmp.lt.s32.totalorder %s27, 8
      // Predicated region
      $region37: #{tpu_custom_call.1} parent=5 // pred_check
        %p234 = pneg %p233
      $region38: #{tpu_custom_call.1} parent=5 // pred_check_branch
        %236 = sbr.rel (%p234) target = $region40
      $region39: #{tpu_custom_call.1} parent=5 // pred_region
        _
      $region40: #{tpu_custom_call.1} parent=5 // pred_fallthru
        _
      %p237 = scmp.le.s32.totalorder 1, %s27
      %p238 = scmp.lt.s32.totalorder %s27, 9
      %p239 = pnand %p237, %p238
      %p240 = pneg %p239
      // Predicated region
      $region41: #{tpu_custom_call.1} parent=5 // pred_check
        _
      $region42: #{tpu_custom_call.1} parent=5 // pred_check_branch
        %242 = sbr.rel (%p239) target = $region44
      $region43: #{tpu_custom_call.1} parent=5 // pred_region
        %s243 = ssub.s32 %s27, 1
        %p244 = pneg %p48
        %p245 = pneg %p45
        %p246 = pneg %p69
        %p247 = pneg %p66
        %p248 = pneg %p90
        %p249 = pneg %p87
        %p250 = pneg %p111
        %p251 = pneg %p108
        %p252 = pneg %p132
        %p253 = pneg %p129
        %p254 = pneg %p153
        %p255 = pneg %p150
        %p256 = pneg %p179
        %p257 = pneg %p176
        %s258 = sand.u32 %s166, 1
        %s259 = scalar_lea.sflag [#allocation6], %s258
        %s260 = sand.u32 %s166, 1
        %s261 = smul.addr %s260, 2
        %s262 = scalar_lea.vmem [#allocation5], %s261
        %p263 = pneg %p200
        %p264 = pneg %p197
        %p266 = scmp.eq.s32.totalorder %s32, 0
        // Predicated region
        $region45: #{tpu_custom_call.1} parent=43 // pred_check
          %p267 = pneg %p266
        $region46: #{tpu_custom_call.1} parent=43 // pred_check_branch
          %269 = sbr.rel (%p267) target = $region48
        $region47: #{tpu_custom_call.1} parent=43 // pred_region
          %v270 = vld [vmem:[%s2] sm:$0x3]
          %vm271 = vcmask 254976
          %272 = vst.msk [vmem:[#allocation2] sm:$0x3] %vm271, %v270
        $region48: #{tpu_custom_call.1} parent=43 // pred_fallthru
          _
        %s273 = sld [smem:[#allocation4 + %s32]]
        %s274 = scalar_lea.vmem %s1, %s273
        %v275 = vld [vmem:[%s274] sm:$0x1]
        %v276 = vld [vmem:[#allocation2] sm:$0x1]
        %v277 = vpack.c.bf16 %v276, %v276
        %v278 = vld [vmem:[%s3] sm:$0xf]
        %v279 = vld [vmem:[%s3 + $0x4] sm:$0xf]
        %v280 = vld [vmem:[%s3 + $0x8] sm:$0xf]
        %v281 = vld [vmem:[%s3 + $0xc] sm:$0xf]
        %v286 = vunpack.c.l.b16 %v278
        %v287 = vunpack.c.l.b16 %v279
        %v288 = vunpack.c.l.b16 %v280
        %v289 = vunpack.c.l.b16 %v281
        %v290 = vpack.c.b16 %v287, %v286
        %v291 = vpack.c.b16 %v289, %v288
        %vm294 = vcmask 261120
        %v296 = vsel %vm294, %v275, 0
        %298 = vmatpush.bf16.msra.mxu0 0
        %299 = vmatpush.bf16.msra.mxu0 0
        %300 = vmatpush.bf16.msra.mxu0 0
        %301 = vmatpush.bf16.msra.mxu0 0
        %302 = vmatpush.bf16.msra.mxu0 0
        %303 = vmatpush.bf16.msra.mxu0 0
        %304 = vmatpush.bf16.msra.mxu0 %v291
        %305 = vmatpush.bf16.msra.mxu0 %v290
        %306 = vmatmul.bf16.gmra.mxu0 %v296
        %v307 = vpop.f32.mrf.mxu0
        %v308 = vadd.f32 0.0, %v307
        %v309 = vpop.f32.mrf.mxu0
        %310 = vdwg.mxu0
        %s311 = scalar_lea.vmem %s3, 16
        %v312 = vld [vmem:[%s311] sm:$0xf]
        %v313 = vld [vmem:[%s311 + $0x4] sm:$0xf]
        %v314 = vld [vmem:[%s311 + $0x8] sm:$0xf]
        %v315 = vld [vmem:[%s311 + $0xc] sm:$0xf]
        %v320 = vunpack.c.l.b16 %v312
        %v321 = vunpack.c.l.b16 %v313
        %v322 = vunpack.c.l.b16 %v314
        %v323 = vunpack.c.l.b16 %v315
        %v324 = vpack.c.b16 %v321, %v320
        %v325 = vpack.c.b16 %v323, %v322
        %v329 = vsel %vm294, %v277, 0
        %331 = vmatpush.bf16.msra.mxu0 0
        %332 = vmatpush.bf16.msra.mxu0 0
        %333 = vmatpush.bf16.msra.mxu0 0
        %334 = vmatpush.bf16.msra.mxu0 0
        %335 = vmatpush.bf16.msra.mxu0 0
        %336 = vmatpush.bf16.msra.mxu0 0
        %337 = vmatpush.bf16.msra.mxu0 %v325
        %338 = vmatpush.bf16.msra.mxu0 %v324
        %339 = vmatmul.bf16.gmra.mxu0 %v329
        %v340 = vpop.f32.mrf.mxu0
        %v341 = vadd.f32 0.0, %v340
        %v342 = vpop.f32.mrf.mxu0
        %343 = vdwg.mxu0
        %v344 = vld [vmem:[%s4] sm:$0x1]
        %v345 = vadd.f32 %v308, %v341
        %v346 = vadd.f32 %v345, %v344
        %v347 = vxor.u32 %v346, 2147483648
        %v348 = vmul.f32 %v347, 1.442695
        %v349 = vpow.pop %v348
        %v350 = vadd.f32 %v349, 1.0
        %v351 = vrcp.pop %v350
        %v352 = vmul.f32 %v350, %v351
        %v353 = vsub.f32 1.0, %v352
        %v354 = vmul.f32 %v351, %v353
        %v355 = vadd.f32 %v351, %v354
        %vm356 = vweird.f32 %v350
        %vm357 = vweird.f32 %v351
        %vm358 = vmor %vm356, %vm357
        %v359 = vsel %vm358, %v351, %v355
        %v360 = vand.u32 2147483647, %v350
        %vm361 = vcmp.eq.f32.partialorder %v360, 8.507059e+37
        %v362 = vand.u32 %v350, 2147483648
        %v363 = vor.u32 1.1754944e-38, %v362
        %v364 = vsel %vm361, %v363, %v359
        %v365 = vmul.f32 1.0, %v364
        %v366 = vadd.f32 %v308, %v344
        %368 = vrot.lane.b32.xlu0 %v344, 96
        %v369 = vpop.permute.xlu0 %368
        %v371 = vadd.f32 %v341, %v369
        %373 = vrot.lane.b32.xlu0 %v371, 64
        %v374 = vpop.permute.xlu0 %373
        %v376 = vmul.f32 %v365, %v374
        %378 = vrot.lane.b32.xlu0 %v376, 64
        %v379 = vpop.permute.xlu0 %378
        %v381 = vadd.f32 %v366, %v379
        %v382 = vtanh.pop %v381
        %384 = vrot.lane.b32.xlu0 %v382, 64
        %v385 = vpop.permute.xlu0 %384
        %v387 = vsub.f32 %v276, %v385
        %389 = vrot.lane.b32.xlu0 %v387, 32
        %v390 = vpop.permute.xlu0 %389
        %v392 = vmul.f32 %v365, %v390
        %394 = vrot.lane.b32.xlu0 %v392, 32
        %v395 = vpop.permute.xlu0 %394
        %v397 = vadd.f32 %v382, %v395
        %399 = vrot.lane.b32.xlu0 %v397, 64
        %v400 = vpop.permute.xlu0 %399
        %vm402 = vcmask 253952
        %403 = vst.msk [vmem:[#allocation2] sm:$0x1] %vm402, %v400
        %v404 = vld [vmem:[#allocation2 + $0x1] sm:$0x1]
        %v405 = vpack.c.bf16 %v397, %v397
        %v406 = vpack.c.bf16 %v404, %v404
        %s407 = scalar_lea.vmem %s3, 32
        %v408 = vld [vmem:[%s407] sm:$0xf]
        %v409 = vld [vmem:[%s407 + $0x4] sm:$0xf]
        %v410 = vld [vmem:[%s407 + $0x8] sm:$0xf]
        %v411 = vld [vmem:[%s407 + $0xc] sm:$0xf]
        %413 = vrot.lane.b32.xlu0 %v405, 64
        %v414 = vpop.permute.xlu0 %413
        %v419 = vunpack.c.l.b16 %v408
        %v420 = vunpack.c.l.b16 %v409
        %v421 = vunpack.c.l.b16 %v410
        %v422 = vunpack.c.l.b16 %v411
        %v423 = vpack.c.b16 %v420, %v419
        %v424 = vpack.c.b16 %v422, %v421
        %v428 = vsel %vm294, %v414, 0
        %430 = vmatpush.bf16.msra.mxu0 0
        %431 = vmatpush.bf16.msra.mxu0 0
        %432 = vmatpush.bf16.msra.mxu0 0
        %433 = vmatpush.bf16.msra.mxu0 0
        %434 = vmatpush.bf16.msra.mxu0 0
        %435 = vmatpush.bf16.msra.mxu0 0
        %436 = vmatpush.bf16.msra.mxu0 %v424
        %437 = vmatpush.bf16.msra.mxu0 %v423
        %438 = vmatmul.bf16.gmra.mxu0 %v428
        %v439 = vpop.f32.mrf.mxu0
        %v440 = vadd.f32 0.0, %v439
        %v441 = vpop.f32.mrf.mxu0
        %442 = vdwg.mxu0
        %s443 = scalar_lea.vmem %s3, 48
        %v444 = vld [vmem:[%s443] sm:$0xf]
        %v445 = vld [vmem:[%s443 + $0x4] sm:$0xf]
        %v446 = vld [vmem:[%s443 + $0x8] sm:$0xf]
        %v447 = vld [vmem:[%s443 + $0xc] sm:$0xf]
        %v452 = vunpack.c.l.b16 %v444
        %v453 = vunpack.c.l.b16 %v445
        %v454 = vunpack.c.l.b16 %v446
        %v455 = vunpack.c.l.b16 %v447
        %v456 = vpack.c.b16 %v453, %v452
        %v457 = vpack.c.b16 %v455, %v454
        %v461 = vsel %vm294, %v406, 0
        %463 = vmatpush.bf16.msra.mxu0 0
        %464 = vmatpush.bf16.msra.mxu0 0
        %465 = vmatpush.bf16.msra.mxu0 0
        %466 = vmatpush.bf16.msra.mxu0 0
        %467 = vmatpush.bf16.msra.mxu0 0
        %468 = vmatpush.bf16.msra.mxu0 0
        %469 = vmatpush.bf16.msra.mxu0 %v457
        %470 = vmatpush.bf16.msra.mxu0 %v456
        %471 = vmatmul.bf16.gmra.mxu0 %v461
        %v472 = vpop.f32.mrf.mxu0
        %v473 = vadd.f32 0.0, %v472
        %v474 = vpop.f32.mrf.mxu0
        %475 = vdwg.mxu0
        %v476 = vld [vmem:[%s4 + $0x1] sm:$0x1]
        %v477 = vadd.f32 %v440, %v473
        %v478 = vadd.f32 %v477, %v476
        %v479 = vxor.u32 %v478, 2147483648
        %v480 = vmul.f32 %v479, 1.442695
        %v481 = vpow.pop %v480
        %v482 = vadd.f32 %v481, 1.0
        %v483 = vrcp.pop %v482
        %v484 = vmul.f32 %v482, %v483
        %v485 = vsub.f32 1.0, %v484
        %v486 = vmul.f32 %v483, %v485
        %v487 = vadd.f32 %v483, %v486
        %vm488 = vweird.f32 %v482
        %vm489 = vweird.f32 %v483
        %vm490 = vmor %vm488, %vm489
        %v491 = vsel %vm490, %v483, %v487
        %v492 = vand.u32 2147483647, %v482
        %vm493 = vcmp.eq.f32.partialorder %v492, 8.507059e+37
        %v494 = vand.u32 %v482, 2147483648
        %v495 = vor.u32 1.1754944e-38, %v494
        %v496 = vsel %vm493, %v495, %v491
        %v497 = vmul.f32 1.0, %v496
        %v498 = vadd.f32 %v440, %v476
        %500 = vrot.lane.b32.xlu0 %v476, 96
        %v501 = vpop.permute.xlu0 %500
        %v503 = vadd.f32 %v473, %v501
        %505 = vrot.lane.b32.xlu0 %v503, 64
        %v506 = vpop.permute.xlu0 %505
        %v508 = vmul.f32 %v497, %v506
        %510 = vrot.lane.b32.xlu0 %v508, 64
        %v511 = vpop.permute.xlu0 %510
        %v513 = vadd.f32 %v498, %v511
        %v514 = vtanh.pop %v513
        %516 = vrot.lane.b32.xlu0 %v514, 64
        %v517 = vpop.permute.xlu0 %516
        %v519 = vsub.f32 %v404, %v517
        %521 = vrot.lane.b32.xlu0 %v519, 32
        %v522 = vpop.permute.xlu0 %521
        %v524 = vmul.f32 %v497, %v522
        %526 = vrot.lane.b32.xlu0 %v524, 32
        %v527 = vpop.permute.xlu0 %526
        %v529 = vadd.f32 %v514, %v527
        %531 = vrot.lane.b32.xlu0 %v529, 64
        %v532 = vpop.permute.xlu0 %531
        %534 = vst.msk [vmem:[#allocation2 + $0x1] sm:$0x1] %vm402, %v532
        %v535 = vpack.c.bf16 %v529, %v529
        %v536 = vld [vmem:[%s5] sm:$0xff]
        %v537 = vld [vmem:[%s5 + $0x8] sm:$0xff]
        %v538 = vld [vmem:[%s5 + $0x10] sm:$0xff]
        %v539 = vld [vmem:[%s5 + $0x18] sm:$0xff]
        %v540 = vld [vmem:[%s6] sm:$0x3]
        %542 = vrot.lane.b32.xlu0 %v535, 64
        %v543 = vpop.permute.xlu0 %542
        %v548 = vunpack.c.l.b16 %v536
        %v549 = vunpack.c.h.b16 %v536
        %v550 = vunpack.c.l.b16 %v537
        %v551 = vunpack.c.h.b16 %v537
        %v552 = vunpack.c.l.b16 %v538
        %v553 = vunpack.c.h.b16 %v538
        %v554 = vunpack.c.l.b16 %v539
        %v555 = vunpack.c.h.b16 %v539
        %v556 = vpack.c.b16 %v550, %v548
        %v557 = vpack.c.b16 %v551, %v549
        %v558 = vpack.c.b16 %v554, %v552
        %v559 = vpack.c.b16 %v555, %v553
        %v565 = vperm.slane %v540, 0
        %v566 = vperm.slane %v540, 1
        %v570 = vsel %vm294, %v543, 0
        %572 = vmatpush.bf16.msra.mxu0 0
        %573 = vmatpush.bf16.msra.mxu0 0
        %574 = vmatpush.bf16.msra.mxu0 0
        %575 = vmatpush.bf16.msra.mxu0 0
        %576 = vmatpush.bf16.msra.mxu0 0
        %577 = vmatpush.bf16.msra.mxu0 0
        %578 = vmatpush.bf16.msra.mxu0 %v558
        %579 = vmatpush.bf16.msra.mxu0 %v556
        %580 = vmatmul.bf16.gmra.mxu0 %v570
        %v581 = vpop.f32.mrf.mxu0
        %v582 = vadd.f32 %v565, %v581
        %v583 = vpop.f32.mrf.mxu0
        %584 = vdwg.mxu0
        %585 = vmatpush.bf16.msra.mxu0 0
        %586 = vmatpush.bf16.msra.mxu0 0
        %587 = vmatpush.bf16.msra.mxu0 0
        %588 = vmatpush.bf16.msra.mxu0 0
        %589 = vmatpush.bf16.msra.mxu0 0
        %590 = vmatpush.bf16.msra.mxu0 0
        %591 = vmatpush.bf16.msra.mxu0 %v559
        %592 = vmatpush.bf16.msra.mxu0 %v557
        %593 = vmatmul.bf16.gmra.mxu0 %v570
        %v594 = vpop.f32.mrf.mxu0
        %v595 = vadd.f32 %v566, %v594
        %v596 = vpop.f32.mrf.mxu0
        %597 = vdwg.mxu0
        %vm598 = vcmask 1040384
        %v599 = vsel %vm598, %v582, -inf
        %v600 = vsel %vm598, %v595, -inf
        %v601 = vmax.f32 %v599, %v600
        %602 = vmax.xlane.f32.xlu0 %v601
        %v603 = vpop.xlane.xlu0 %602
        %v604 = vsub.f32 %v582, %v603
        %v605 = vsub.f32 %v595, %v603
        %v606 = vmul.f32 %v604, 1.442695
        %v607 = vpow.pop %v606
        %v608 = vmul.f32 %v605, 1.442695
        %v609 = vpow.pop %v608
        %v610 = vsel %vm598, %v607, 0.0
        %v611 = vsel %vm598, %v609, 0.0
        %v612 = vadd.f32 %v610, %v611
        %613 = vadd.xlane.f32.xlu0 %v612
        %v614 = vpop.xlane.xlu0 %613
        %v615 = vlog2.pop %v614
        %v616 = vmul.f32 %v615, 0.6931472
        %v617 = vsub.f32 %v604, %v616
        %v618 = vsub.f32 %v605, %v616
        %v621 = vrot.slane %v618, 7
        %v622 = vsel %vm598, %v617, %v621
        %v624 = vlaneseq
        %vm625 = vcmp.ge.s32.totalorder %v624, 0
        %vm626 = vcmp.lt.s32.totalorder %v624, 256
        %vm627 = vmand %vm625, %vm626
        %628 = vst.msk [vmem:[%s262] sm:$0x3] %vm627, %v622
        %p629 = scmp.eq.s32.totalorder %s32, 7
        // Predicated region
        $region49: #{tpu_custom_call.1} parent=43 // pred_check
          %p630 = pneg %p629
        $region50: #{tpu_custom_call.1} parent=43 // pred_check_branch
          %632 = sbr.rel (%p630) target = $region52
        $region51: #{tpu_custom_call.1} parent=43 // pred_region
          %v633 = vld [vmem:[#allocation2] sm:$0x3]
          %vm634 = vcmask 254976
          %635 = vst.msk [vmem:[#allocation7] sm:$0x3] %vm634, %v633
        $region52: #{tpu_custom_call.1} parent=43 // pred_fallthru
          _
        %s636 = sand.u32 %s166, 1
        %s637 = scalar_lea.sflag [#allocation6], %s636
        %s638 = sand.u32 %s166, 1
        %s639 = smul.addr %s638, 2
        %s640 = scalar_lea.vmem [#allocation5], %s639
        // Predicated region
        $region53: #{tpu_custom_call.1} parent=43 // pred_check
          %p641 = pneg %p176
        $region54: #{tpu_custom_call.1} parent=43 // pred_check_branch
          %643 = sbr.rel (%p641) target = $region56
        $region55: #{tpu_custom_call.1} parent=43 // pred_region
          %645 = vsyncadd %s637, 0
          %s646 = smul.addr %s32, 2
          %s647 = scalar_lea.hbm %s7, %s646
          %s649 = sshll.u32 %s640, 4
          %s650 = int_to_ptr.vmem [resolvable:$true] %s649
          %s651 = sshll.u32 %s647, 4
          %s652 = int_to_ptr.hbm [resolvable:$true] %s651
          %654 = dma.vmem_to_hbm [thread:$0]  %s650, 32, %s652, %s637
        $region56: #{tpu_custom_call.1} parent=43 // pred_fallthru
          _
        // Predicated region
        $region57: #{tpu_custom_call.1} parent=43 // pred_check
          %p655 = pneg %p197
        $region58: #{tpu_custom_call.1} parent=43 // pred_check_branch
          %657 = sbr.rel (%p655) target = $region60
        $region59: #{tpu_custom_call.1} parent=43 // pred_region
          %659 = vsyncadd [#allocation8], 0
          %s661 = sshll.u32 [#allocation7], 4
          %s662 = int_to_ptr.vmem [resolvable:$true] %s661
          %s663 = sshll.u32 %s8, 4
          %s664 = int_to_ptr.hbm [resolvable:$true] %s663
          %666 = dma.vmem_to_hbm [thread:$0]  %s662, 32, %s664, [#allocation8]
        $region60: #{tpu_custom_call.1} parent=43 // pred_fallthru
          _
        // Predicated region
        $region61: #{tpu_custom_call.1} parent=43 // pred_check
          %p667 = pneg %p197
        $region62: #{tpu_custom_call.1} parent=43 // pred_check_branch
          %669 = sbr.rel (%p667) target = $region64
        $region63: #{tpu_custom_call.1} parent=43 // pred_region
          %671 = dma.done [#allocation8], 32
        $region64: #{tpu_custom_call.1} parent=43 // pred_fallthru
          _
      $region44: #{tpu_custom_call.1} parent=5 // pred_fallthru
        _
      %p672 = scmp.le.s32.totalorder 2, %s27
      // Predicated region
      $region65: #{tpu_custom_call.1} parent=5 // pred_check
        %p673 = pneg %p672
      $region66: #{tpu_custom_call.1} parent=5 // pred_check_branch
        %675 = sbr.rel (%p673) target = $region68
      $region67: #{tpu_custom_call.1} parent=5 // pred_region
        %s676 = ssub.s32 %s27, 2
        // Predicated region
        $region69: #{tpu_custom_call.1} parent=67 // pred_check
          %p677 = pneg %p182
        $region70: #{tpu_custom_call.1} parent=67 // pred_check_branch
          %679 = sbr.rel (%p677) target = $region72
        $region71: #{tpu_custom_call.1} parent=67 // pred_region
          %s680 = sand.u32 %s167, 1
          %s681 = scalar_lea.sflag [#allocation6], %s680
          %s682 = sand.u32 %s167, 1
          %s683 = smul.addr %s682, 2
          %s684 = scalar_lea.vmem [#allocation5], %s683
          %686 = dma.done %s681, 32
        $region72: #{tpu_custom_call.1} parent=67 // pred_fallthru
          _
      $region68: #{tpu_custom_call.1} parent=5 // pred_fallthru
        _
    $region6: #{tpu_custom_call.1} parent=1 // loop_footer
      %s31 = sadd.s32 1, %s27
    $region7: #{tpu_custom_call.1} parent=1 // loop_footer_branch
      %26 = sbr.rel target = $region3
    $region8: #{tpu_custom_call.1} parent=1 // loop_exit
      _
    %687 = vsyncpa [#allocation6], 1
    %s688 = scalar_lea.sflag [#allocation6], 1
    %689 = vsyncpa %s688, 1
    %690 = vsyncpa [#allocation8], 1

</llo_original>
